<compile_context>
chip_gen: v6e
topology: v6e:2x2x1
jax: 0.10.0
libtpu: 0.0.40
codegen_flags: <defaults>
</compile_context>

<pallas_src>
import jax
import jax.numpy as jnp
from jax.experimental import pallas as pl
from jax.experimental.pallas import tpu as pltpu


def _prompt_concat_kernel(prefix_ref, ctx_ref, suffix_ref, out_ref):
    """Assemble (BC, seq, d) in registers; single unmasked full-block store."""
    # Two 2-operand concats along the sublane axis keep the lowering on the
    # well-supported path (XLU sublane shifts, separate issue slot from VPU).
    head = jnp.concatenate([prefix_ref[...], ctx_ref[...]], axis=1)
    out_ref[...] = jnp.concatenate([head, suffix_ref[...]], axis=1)


def _prompt_concat_kernel_slices(prefix_ref, ctx_ref, suffix_ref, out_ref):
    """Known-good fallback: three static sub-block writes (masked stores)."""
    n_pre = prefix_ref.shape[1]
    n_ctx = ctx_ref.shape[1]
    out_ref[:, :n_pre, :] = prefix_ref[...]
    out_ref[:, n_pre:n_pre + n_ctx, :] = ctx_ref[...]
    out_ref[:, n_pre + n_ctx:, :] = suffix_ref[...]


def prompt_learner_forward(token_prefix, ctx, token_suffix, *,
                           block_classes=None,
                           target_block_bytes=1 << 20,
                           vmem_limit_bytes=None):
    """Pallas equivalent of PromptLearner_domain.forward().

    Args:
      token_prefix: (n_cls, 1, ctx_dim)     frozen SOS-token embeddings.
      ctx:          (n_cls, n_ctx, ctx_dim) learned context (CSC layout).
      token_suffix: (n_cls, n_suf, ctx_dim) frozen class-name/EOS embeddings.
    Returns:
      prompts:      (n_cls, 1 + n_ctx + n_suf, ctx_dim)
    """
    if token_prefix.ndim != 3 or ctx.ndim != 3 or token_suffix.ndim != 3:
        raise ValueError("expected (n_cls, tokens, ctx_dim) CSC-layout inputs")

    n_cls, n_pre, ctx_dim = token_prefix.shape
    _, n_ctx, _ = ctx.shape
    _, n_suf, _ = token_suffix.shape
    seq_len = n_pre + n_ctx + n_suf

    # torch.cat requires matching dtypes; make the promotion explicit here.
    dtype = jnp.result_type(token_prefix.dtype, ctx.dtype, token_suffix.dtype)
    token_prefix = token_prefix.astype(dtype)
    ctx = ctx.astype(dtype)
    token_suffix = token_suffix.astype(dtype)

    # --- pick the number of classes per block (BC) --------------------------
    itemsize = jnp.dtype(dtype).itemsize
    out_row_bytes = seq_len * ctx_dim * itemsize          # one class, out block
    if block_classes is None:
        bc = max(1, min(n_cls, target_block_bytes // max(out_row_bytes, 1)))
    else:
        bc = max(1, min(n_cls, int(block_classes)))
    while n_cls % bc:                                      # full blocks only
        bc -= 1
    grid = (n_cls // bc,)

    # Per step: inputs + output ~= 2 * bc * out_row_bytes; double-buffered x2.
    if vmem_limit_bytes is None:
        vmem_limit_bytes = int(min(32 * 1024 * 1024,
                                   max(4 * 1024 * 1024, 6 * bc * out_row_bytes)))

    def build(kernel):
        return pl.pallas_call(
            kernel,
            out_shape=jax.ShapeDtypeStruct((n_cls, seq_len, ctx_dim), dtype),
            grid_spec=pltpu.PrefetchScalarGridSpec(
                num_scalar_prefetch=0,
                grid=grid,
                in_specs=[
                    pl.BlockSpec((bc, n_pre, ctx_dim), lambda i: (i, 0, 0)),
                    pl.BlockSpec((bc, n_ctx, ctx_dim), lambda i: (i, 0, 0)),
                    pl.BlockSpec((bc, n_suf, ctx_dim), lambda i: (i, 0, 0)),
                ],
                out_specs=pl.BlockSpec((bc, seq_len, ctx_dim),
                                       lambda i: (i, 0, 0)),
            ),
            compiler_params=pltpu.CompilerParams(
                dimension_semantics=("parallel",),
                vmem_limit_bytes=vmem_limit_bytes),
        )(token_prefix, ctx, token_suffix)

    try:
        return build(_prompt_concat_kernel)
    except Exception:
        # TODO(synk): drop this fallback once unaligned sublane-concat lowering
        # is confirmed for all production dtypes (bf16/fp16) on the deployed
        # jax/libtpu; the fallback uses the previously-validated (but slower on
        # v5e) three masked sub-block stores.
        return build(_prompt_concat_kernel_slices)


if __name__ == "__main__":
    # Small, deterministic synthetic configuration (CSC = class-specific ctx).
    n_cls = 4        # number of domain classes
    n_ctx = 8        # number of context tokens
    seq_len = 16     # tokenized prompt length (CLIP uses 77; small here)
    ctx_dim = 128    # transformer width (CLIP ln_final width; lane-friendly)
    n_suf = seq_len - 1 - n_ctx

    key = jax.random.PRNGKey(0)
    k_ctx, k_pre, k_suf = jax.random.split(key, 3)

    # nn.init.normal_(ctx_vectors, std=0.02)
    ctx = (0.02 * jax.random.normal(k_ctx, (n_cls, n_ctx, ctx_dim))).astype(
        jnp.float32)
    # token_prefix / token_suffix: synthetic frozen CLIP token embeddings.
    token_prefix = jax.random.normal(k_pre, (n_cls, 1, ctx_dim),
                                     dtype=jnp.float32)
    token_suffix = jax.random.normal(k_suf, (n_cls, n_suf, ctx_dim),
                                     dtype=jnp.float32)

    ref = jnp.concatenate([token_prefix, ctx, token_suffix], axis=1)

    # Default path: auto-picked BC (covers all classes -> single grid step).
    prompts = prompt_learner_forward(token_prefix, ctx, token_suffix)
    prompts = jax.block_until_ready(prompts)
    assert prompts.shape == (n_cls, seq_len, ctx_dim), prompts.shape
    assert prompts.dtype == ref.dtype
    assert bool(jnp.array_equal(prompts, ref))

    # Also exercise the multi-step grid path (2 classes per block -> grid=(2,)).
    prompts2 = prompt_learner_forward(token_prefix, ctx, token_suffix,
                                      block_classes=2)
    prompts2 = jax.block_until_ready(prompts2)
    assert bool(jnp.array_equal(prompts2, ref))

    print("KERNEL_OK")
</pallas_src>

<mosaic_0001>
module attributes {stable_mosaic.version = 11 : i64} {
  func.func @_prompt_concat_kernel(%arg0: i32, %arg1: memref<4x1x128xf32, #tpu.memory_space<vmem>>, %arg2: memref<4x8x128xf32, #tpu.memory_space<vmem>>, %arg3: memref<4x7x128xf32, #tpu.memory_space<vmem>>, %arg4: memref<4x16x128xf32, #tpu.memory_space<vmem>>) attributes {dimension_semantics = [#tpu.dimension_semantics<parallel>], iteration_bounds = array<i64: 1>, scalar_prefetch = 0 : i64, scratch_operands = 0 : i64, tpu.core_type = #tpu.core_type<tc>, window_params = [{transform_indices = @transform_0, window_bounds = array<i64: 4, 1, 128>}, {transform_indices = @transform_1, window_bounds = array<i64: 4, 8, 128>}, {transform_indices = @transform_2, window_bounds = array<i64: 4, 7, 128>}, {transform_indices = @transform_3, window_bounds = array<i64: 4, 16, 128>}]} {
    %c0 = arith.constant 0 : index
    %c0_0 = arith.constant 0 : index
    %c0_1 = arith.constant 0 : index
    %0 = vector.load %arg1[%c0, %c0_0, %c0_1] : memref<4x1x128xf32, #tpu.memory_space<vmem>>, vector<4x1x128xf32>
    %c0_2 = arith.constant 0 : index
    %c0_3 = arith.constant 0 : index
    %c0_4 = arith.constant 0 : index
    %1 = vector.load %arg2[%c0_2, %c0_3, %c0_4] : memref<4x8x128xf32, #tpu.memory_space<vmem>>, vector<4x8x128xf32>
    %2 = tpu.concatenate %0, %1 in 1 : vector<4x1x128xf32>, vector<4x8x128xf32> -> vector<4x9x128xf32>
    %c0_5 = arith.constant 0 : index
    %c0_6 = arith.constant 0 : index
    %c0_7 = arith.constant 0 : index
    %3 = vector.load %arg3[%c0_5, %c0_6, %c0_7] : memref<4x7x128xf32, #tpu.memory_space<vmem>>, vector<4x7x128xf32>
    %4 = tpu.concatenate %2, %3 in 1 : vector<4x9x128xf32>, vector<4x7x128xf32> -> vector<4x16x128xf32>
    %c0_8 = arith.constant 0 : index
    %c0_9 = arith.constant 0 : index
    %c0_10 = arith.constant 0 : index
    %5 = vector.load %arg4[%c0_8, %c0_9, %c0_10] : memref<4x16x128xf32, #tpu.memory_space<vmem>>, vector<4x16x128xf32>
    tpu.vector_store %arg4[%c0_8, %c0_9, %c0_10], %4 {strides = array<i32>} : memref<4x16x128xf32, #tpu.memory_space<vmem>>, vector<4x16x128xf32>,
    return
  }
  func.func @transform_0(%arg0: i32) -> (i32, i32, i32) {
    %c0_i32 = arith.constant 0 : i32
    %c0_i32_0 = arith.constant 0 : i32
    %c0_i32_1 = arith.constant 0 : i32
    return %arg0, %c0_i32, %c0_i32_0 : i32, i32, i32
  }
  func.func @transform_1(%arg0: i32) -> (i32, i32, i32) {
    %c0_i32 = arith.constant 0 : i32
    %c0_i32_0 = arith.constant 0 : i32
    %c0_i32_1 = arith.constant 0 : i32
    return %arg0, %c0_i32, %c0_i32_0 : i32, i32, i32
  }
  func.func @transform_2(%arg0: i32) -> (i32, i32, i32) {
    %c0_i32 = arith.constant 0 : i32
    %c0_i32_0 = arith.constant 0 : i32
    %c0_i32_1 = arith.constant 0 : i32
    return %arg0, %c0_i32, %c0_i32_0 : i32, i32, i32
  }
  func.func @transform_3(%arg0: i32) -> (i32, i32, i32) {
    %c0_i32 = arith.constant 0 : i32
    %c0_i32_0 = arith.constant 0 : i32
    %c0_i32_1 = arith.constant 0 : i32
    return %arg0, %c0_i32, %c0_i32_0 : i32, i32, i32
  }
}

module attributes {stable_mosaic.version = 11 : i64} {
  func.func @_prompt_concat_kernel_slices(%arg0: i32, %arg1: memref<4x1x128xf32, #tpu.memory_space<vmem>>, %arg2: memref<4x8x128xf32, #tpu.memory_space<vmem>>, %arg3: memref<4x7x128xf32, #tpu.memory_space<vmem>>, %arg4: memref<4x16x128xf32, #tpu.memory_space<vmem>>) attributes {dimension_semantics = [#tpu.dimension_semantics<parallel>], iteration_bounds = array<i64: 1>, scalar_prefetch = 0 : i64, scratch_operands = 0 : i64, tpu.core_type = #tpu.core_type<tc>, window_params = [{transform_indices = @transform_0, window_bounds = array<i64: 4, 1, 128>}, {transform_indices = @transform_1, window_bounds = array<i64: 4, 8, 128>}, {transform_indices = @transform_2, window_bounds = array<i64: 4, 7, 128>}, {transform_indices = @transform_3, window_bounds = array<i64: 4, 16, 128>}]} {
    %c0 = arith.constant 0 : index
    %c0_0 = arith.constant 0 : index
    %c0_1 = arith.constant 0 : index
    %0 = vector.load %arg1[%c0, %c0_0, %c0_1] : memref<4x1x128xf32, #tpu.memory_space<vmem>>, vector<4x1x128xf32>
    %c0_2 = arith.constant 0 : index
    %c0_3 = arith.constant 0 : index
    %c0_4 = arith.constant 0 : index
    %1 = vector.load %arg4[%c0_2, %c0_3, %c0_4] : memref<4x16x128xf32, #tpu.memory_space<vmem>>, vector<4x1x128xf32>
    tpu.vector_store %arg4[%c0_2, %c0_3, %c0_4], %0 {strides = array<i32>} : memref<4x16x128xf32, #tpu.memory_space<vmem>>, vector<4x1x128xf32>,
    %c0_5 = arith.constant 0 : index
    %c0_6 = arith.constant 0 : index
    %c0_7 = arith.constant 0 : index
    %2 = vector.load %arg2[%c0_5, %c0_6, %c0_7] : memref<4x8x128xf32, #tpu.memory_space<vmem>>, vector<4x8x128xf32>
    %c0_8 = arith.constant 0 : index
    %c1 = arith.constant 1 : index
    %c0_9 = arith.constant 0 : index
    %3 = vector.load %arg4[%c0_8, %c1, %c0_9] : memref<4x16x128xf32, #tpu.memory_space<vmem>>, vector<4x8x128xf32>
    tpu.vector_store %arg4[%c0_8, %c1, %c0_9], %2 {strides = array<i32>} : memref<4x16x128xf32, #tpu.memory_space<vmem>>, vector<4x8x128xf32>,
    %c0_10 = arith.constant 0 : index
    %c0_11 = arith.constant 0 : index
    %c0_12 = arith.constant 0 : index
    %4 = vector.load %arg3[%c0_10, %c0_11, %c0_12] : memref<4x7x128xf32, #tpu.memory_space<vmem>>, vector<4x7x128xf32>
    %c0_13 = arith.constant 0 : index
    %c9 = arith.constant 9 : index
    %c0_14 = arith.constant 0 : index
    %5 = vector.load %arg4[%c0_13, %c9, %c0_14] : memref<4x16x128xf32, #tpu.memory_space<vmem>>, vector<4x7x128xf32>
    tpu.vector_store %arg4[%c0_13, %c9, %c0_14], %4 {strides = array<i32>} : memref<4x16x128xf32, #tpu.memory_space<vmem>>, vector<4x7x128xf32>,
    return
  }
  func.func @transform_0(%arg0: i32) -> (i32, i32, i32) {
    %c0_i32 = arith.constant 0 : i32
    %c0_i32_0 = arith.constant 0 : i32
    %c0_i32_1 = arith.constant 0 : i32
    return %arg0, %c0_i32, %c0_i32_0 : i32, i32, i32
  }
  func.func @transform_1(%arg0: i32) -> (i32, i32, i32) {
    %c0_i32 = arith.constant 0 : i32
    %c0_i32_0 = arith.constant 0 : i32
    %c0_i32_1 = arith.constant 0 : i32
    return %arg0, %c0_i32, %c0_i32_0 : i32, i32, i32
  }
  func.func @transform_2(%arg0: i32) -> (i32, i32, i32) {
    %c0_i32 = arith.constant 0 : i32
    %c0_i32_0 = arith.constant 0 : i32
    %c0_i32_1 = arith.constant 0 : i32
    return %arg0, %c0_i32, %c0_i32_0 : i32, i32, i32
  }
  func.func @transform_3(%arg0: i32) -> (i32, i32, i32) {
    %c0_i32 = arith.constant 0 : i32
    %c0_i32_0 = arith.constant 0 : i32
    %c0_i32_1 = arith.constant 0 : i32
    return %arg0, %c0_i32, %c0_i32_0 : i32, i32, i32
  }
}

</mosaic_0001>

<llo_original>
// kernel: tpu_custom_call.1
$region0: #{tpu_custom_call.1}
  #allocation0 [shape = 'u32[]', space=smem, size = 0x4, offset = 0x4, fixed_abs, tag = 'smem constant byte address 0x4 - core index']
  #allocation1 [shape = 'u32[144,128]{1,0:T(1,128)}', space=vmem, size = 0x12000, scoped, tag = 'internal scratch']
  %s0 = inlined_call_operand.vmem [shape: f32[4,1,128], index: 0, kind: input, shape index: {}]
  %s1 = inlined_call_operand.vmem [shape: f32[4,8,128], index: 1, kind: input, shape index: {}]
  %s2 = inlined_call_operand.vmem [shape: f32[4,7,128], index: 2, kind: input, shape index: {}]
  %s3 = inlined_call_operand.hbm [shape: f32[4,16,128], index: 3, kind: output, shape index: {}]
  %s4 = sld [smem:[#allocation0]]
  $region22: #{tpu_custom_call.1} parent=0
    _
  %s6 = ssub.s32 1, %s4
  %s7 = scalar_select 0, %s6, %s4
  $region1: #{tpu_custom_call.1} parent=0
    #allocation2 [shape = 'u8[32768]{0}', space=vmem, size = 0x8000, scoped, tag = 'output window, operand 0, single buffered']
    #allocation3 [shape = 's32[1]{0}', space=sflag, size = 0x4, scoped, tag = 'scoped memory for tpu_custom_call.1']
    %8 = vsyncpa [#allocation3], 0
    // Predicated region
    $region2: #{tpu_custom_call.1} parent=1 // pred_check
      _
    $region3: #{tpu_custom_call.1} parent=1 // pred_check_branch
      %10 = sbr.rel (0) target = $region5
    $region4: #{tpu_custom_call.1} parent=1 // pred_region
      _
    $region5: #{tpu_custom_call.1} parent=1 // pred_fallthru
      _
    // Predicated region
    $region6: #{tpu_custom_call.1} parent=1 // pred_check
      _
    $region7: #{tpu_custom_call.1} parent=1 // pred_check_branch
      %12 = sbr.rel (0) target = $region9
    $region8: #{tpu_custom_call.1} parent=1 // pred_region
      _
    $region9: #{tpu_custom_call.1} parent=1 // pred_fallthru
      _
    // Predicated region
    $region10: #{tpu_custom_call.1} parent=1 // pred_check
      _
    $region11: #{tpu_custom_call.1} parent=1 // pred_check_branch
      %14 = sbr.rel (0) target = $region13
    $region12: #{tpu_custom_call.1} parent=1 // pred_region
      _
    $region13: #{tpu_custom_call.1} parent=1 // pred_fallthru
      _
    %v15 = vld [vmem:[%s0] sm:$0x1]
    %v16 = vld [vmem:[%s0 + $0x1] sm:$0x1]
    %v17 = vld [vmem:[%s0 + $0x2] sm:$0x1]
    %v18 = vld [vmem:[%s0 + $0x3] sm:$0x1]
    %v19 = vld [vmem:[%s1] sm:$0xff]
    %v20 = vld [vmem:[%s1 + $0x8] sm:$0xff]
    %v21 = vld [vmem:[%s1 + $0x10] sm:$0xff]
    %v22 = vld [vmem:[%s1 + $0x18] sm:$0xff]
    %v27 = vrot.slane %v19, 7
    %v28 = vrot.slane %v20, 7
    %v29 = vrot.slane %v21, 7
    %v30 = vrot.slane %v22, 7
    %vm35 = vcmask 1040384
    %v36 = vsel %vm35, %v15, %v27
    %v37 = vsel %vm35, %v16, %v28
    %v38 = vsel %vm35, %v17, %v29
    %v39 = vsel %vm35, %v18, %v30
    %v40 = vld [vmem:[%s2] sm:$0x7f]
    %v41 = vld [vmem:[%s2 + $0x8] sm:$0x7f]
    %v42 = vld [vmem:[%s2 + $0x10] sm:$0x7f]
    %v43 = vld [vmem:[%s2 + $0x18] sm:$0x7f]
    %v48 = vrot.slane %v40, 7
    %v49 = vrot.slane %v41, 7
    %v50 = vrot.slane %v42, 7
    %v51 = vrot.slane %v43, 7
    %v56 = vsel %vm35, %v27, %v48
    %v57 = vsel %vm35, %v28, %v49
    %v58 = vsel %vm35, %v29, %v50
    %v59 = vsel %vm35, %v30, %v51
    %60 = vst [vmem:[#allocation2] sm:$0xff] %v36
    %61 = vst [vmem:[#allocation2 + $0x8] sm:$0xff] %v56
    %62 = vst [vmem:[#allocation2 + $0x10] sm:$0xff] %v37
    %63 = vst [vmem:[#allocation2 + $0x18] sm:$0xff] %v57
    %64 = vst [vmem:[#allocation2 + $0x20] sm:$0xff] %v38
    %65 = vst [vmem:[#allocation2 + $0x28] sm:$0xff] %v58
    %66 = vst [vmem:[#allocation2 + $0x30] sm:$0xff] %v39
    %67 = vst [vmem:[#allocation2 + $0x38] sm:$0xff] %v59
    // Predicated region
    $region14: #{tpu_custom_call.1} parent=1 // pred_check
      _
    $region15: #{tpu_custom_call.1} parent=1 // pred_check_branch
      %69 = sbr.rel (0) target = $region17
    $region16: #{tpu_custom_call.1} parent=1 // pred_region
      %s71 = ssub.s32 1024, 1024
      %72 = vsyncadd [#allocation3], %s71
      %s73 = sshll.u32 [#allocation2], 4
      %s74 = int_to_ptr.vmem [resolvable:$true] %s73
      %79 = dma.vmem_to_hbm [thread:$0]  %s74, 1024, %s3, [#allocation3], 128, 128, 8
    $region17: #{tpu_custom_call.1} parent=1 // pred_fallthru
      _
    // Predicated region
    $region18: #{tpu_custom_call.1} parent=1 // pred_check
      _
    $region19: #{tpu_custom_call.1} parent=1 // pred_check_branch
      %81 = sbr.rel (0) target = $region21
    $region20: #{tpu_custom_call.1} parent=1 // pred_region
      %82 = dma.done [#allocation3], 1024
    $region21: #{tpu_custom_call.1} parent=1 // pred_fallthru
      _
    %83 = vsyncpa [#allocation3], 1

// kernel: tpu_custom_call.1
$region0: #{tpu_custom_call.1}
  #allocation0 [shape = 'u32[]', space=smem, size = 0x4, offset = 0x4, fixed_abs, tag = 'smem constant byte address 0x4 - core index']
  #allocation1 [shape = 'u32[144,128]{1,0:T(1,128)}', space=vmem, size = 0x12000, scoped, tag = 'internal scratch']
  %s0 = inlined_call_operand.vmem [shape: f32[4,1,128], index: 0, kind: input, shape index: {}]
  %s1 = inlined_call_operand.vmem [shape: f32[4,8,128], index: 1, kind: input, shape index: {}]
  %s2 = inlined_call_operand.vmem [shape: f32[4,7,128], index: 2, kind: input, shape index: {}]
  %s3 = inlined_call_operand.hbm [shape: f32[4,16,128], index: 3, kind: output, shape index: {}]
  %s4 = sld [smem:[#allocation0]]
  $region22: #{tpu_custom_call.1} parent=0
    _
  %s6 = ssub.s32 1, %s4
  %s7 = scalar_select 0, %s6, %s4
  $region1: #{tpu_custom_call.1} parent=0
    #allocation2 [shape = 'u8[32768]{0}', space=vmem, size = 0x8000, scoped, tag = 'output window, operand 0, single buffered']
    #allocation3 [shape = 's32[1]{0}', space=sflag, size = 0x4, scoped, tag = 'scoped memory for tpu_custom_call.1']
    %8 = vsyncpa [#allocation3], 0
    // Predicated region
    $region2: #{tpu_custom_call.1} parent=1 // pred_check
      _
    $region3: #{tpu_custom_call.1} parent=1 // pred_check_branch
      %10 = sbr.rel (0) target = $region5
    $region4: #{tpu_custom_call.1} parent=1 // pred_region
      _
    $region5: #{tpu_custom_call.1} parent=1 // pred_fallthru
      _
    // Predicated region
    $region6: #{tpu_custom_call.1} parent=1 // pred_check
      _
    $region7: #{tpu_custom_call.1} parent=1 // pred_check_branch
      %12 = sbr.rel (0) target = $region9
    $region8: #{tpu_custom_call.1} parent=1 // pred_region
      _
    $region9: #{tpu_custom_call.1} parent=1 // pred_fallthru
      _
    // Predicated region
    $region10: #{tpu_custom_call.1} parent=1 // pred_check
      _
    $region11: #{tpu_custom_call.1} parent=1 // pred_check_branch
      %14 = sbr.rel (0) target = $region13
    $region12: #{tpu_custom_call.1} parent=1 // pred_region
      _
    $region13: #{tpu_custom_call.1} parent=1 // pred_fallthru
      _
    %v15 = vld [vmem:[%s0] sm:$0x1]
    %v16 = vld [vmem:[%s0 + $0x1] sm:$0x1]
    %v17 = vld [vmem:[%s0 + $0x2] sm:$0x1]
    %v18 = vld [vmem:[%s0 + $0x3] sm:$0x1]
    %19 = vst [vmem:[#allocation2] sm:$0x1] %v15
    %20 = vst [vmem:[#allocation2 + $0x10] sm:$0x1] %v16
    %21 = vst [vmem:[#allocation2 + $0x20] sm:$0x1] %v17
    %22 = vst [vmem:[#allocation2 + $0x30] sm:$0x1] %v18
    %v23 = vld [vmem:[%s1] sm:$0xff]
    %v24 = vld [vmem:[%s1 + $0x8] sm:$0xff]
    %v25 = vld [vmem:[%s1 + $0x10] sm:$0xff]
    %v26 = vld [vmem:[%s1 + $0x18] sm:$0xff]
    %27 = vst [vmem:[#allocation2 + $0x1] sm:$0xff] %v23
    %28 = vst [vmem:[#allocation2 + $0x11] sm:$0xff] %v24
    %29 = vst [vmem:[#allocation2 + $0x21] sm:$0xff] %v25
    %30 = vst [vmem:[#allocation2 + $0x31] sm:$0xff] %v26
    %v31 = vld [vmem:[%s2] sm:$0x7f]
    %v32 = vld [vmem:[%s2 + $0x8] sm:$0x7f]
    %v33 = vld [vmem:[%s2 + $0x10] sm:$0x7f]
    %v34 = vld [vmem:[%s2 + $0x18] sm:$0x7f]
    %35 = vst [vmem:[#allocation2 + $0x9] sm:$0x7f] %v31
    %36 = vst [vmem:[#allocation2 + $0x19] sm:$0x7f] %v32
    %37 = vst [vmem:[#allocation2 + $0x29] sm:$0x7f] %v33
    %38 = vst [vmem:[#allocation2 + $0x39] sm:$0x7f] %v34
    // Predicated region
    $region14: #{tpu_custom_call.1} parent=1 // pred_check
      _
    $region15: #{tpu_custom_call.1} parent=1 // pred_check_branch
      %40 = sbr.rel (0) target = $region17
    $region16: #{tpu_custom_call.1} parent=1 // pred_region
      %s42 = ssub.s32 1024, 1024
      %43 = vsyncadd [#allocation3], %s42
      %s44 = sshll.u32 [#allocation2], 4
      %s45 = int_to_ptr.vmem [resolvable:$true] %s44
      %50 = dma.vmem_to_hbm [thread:$0]  %s45, 1024, %s3, [#allocation3], 128, 128, 8
    $region17: #{tpu_custom_call.1} parent=1 // pred_fallthru
      _
    // Predicated region
    $region18: #{tpu_custom_call.1} parent=1 // pred_check
      _
    $region19: #{tpu_custom_call.1} parent=1 // pred_check_branch
      %52 = sbr.rel (0) target = $region21
    $region20: #{tpu_custom_call.1} parent=1 // pred_region
      %53 = dma.done [#allocation3], 1024
    $region21: #{tpu_custom_call.1} parent=1 // pred_fallthru
      _
    %54 = vsyncpa [#allocation3], 1

</llo_original>
